<compile_context>
chip_gen: v5e
topology: v5e:2x2
jax: 0.10.0
libtpu: 0.0.40
codegen_flags: <defaults>
</compile_context>

<pallas_src>
import math

import jax
import jax.numpy as jnp
from jax import lax
from jax.experimental import pallas as pl
from jax.experimental.pallas import tpu as pltpu

LANE = 128
SUBLANE = 8
BN_EPS = 1e-5
NEG_SLOPE = 0.01                      # nn.LeakyReLU() default
VMEM_LIMIT = 48 * 1024 * 1024         # fits under v7x's 64 MiB physical VMEM


def _round_up(x, m):
    return ((x + m - 1) // m) * m


def _row_tile(np_):
    """Largest row tile in {512,256,128} dividing the 128-padded node count."""
    for tm in (512, 256, 128):
        if np_ % tm == 0:
            return tm
    return np_


def _pad2(x, rows, cols):
    pr, pc = rows - x.shape[0], cols - x.shape[1]
    if pr == 0 and pc == 0:
        return x
    return jnp.pad(x, ((0, pr), (0, pc)))


def prepare_adjacency(A):
    """Pad the node axis to a multiple of 128 and cast to bf16 ONCE.

    The graph is static across training steps, so callers should cache this
    result; inside the jitted forward the pad/cast then become no-ops and the
    dominant NxN arrays are read at 2 B/elem straight into the kernel."""
    np_ = _round_up(A.shape[0], LANE)
    return _pad2(A, np_, np_).astype(jnp.bfloat16)


# --------------------------------------------------------------------------
# Kernels
# --------------------------------------------------------------------------
def _adj_matmul_stats_kernel(a_ref, rhs_ref, out_ref, s_ref, ss_ref):
    """out tile = A row-tile @ RHS (bf16 operands, f32 MXU accumulation),
    plus per-tile partial BatchNorm statistics (sum, sum of squares)."""
    h = jnp.dot(a_ref[...], rhs_ref[...], preferred_element_type=jnp.float32)
    out_ref[...] = h
    # /8-replicated across sublanes so the wrapper reduces with a single sum
    # over all rows (exact: /8 and the 8x replication-sum are powers of two).
    s_ref[...] = jnp.broadcast_to(
        jnp.sum(h, axis=0, keepdims=True) * 0.125, s_ref.shape)
    ss_ref[...] = jnp.broadcast_to(
        jnp.sum(h * h, axis=0, keepdims=True) * 0.125, ss_ref.shape)


def _bn_act_proj_kernel(h_ref, scale_ref, shift_ref, w2_ref, hw_ref):
    """BN1 (single FMA, f32) + LeakyReLU + (h @ W2) -> bf16 tile."""
    h = h_ref[...] * scale_ref[...] + shift_ref[...]
    h = jnp.where(h >= 0, h, NEG_SLOPE * h)
    hw_ref[...] = jnp.dot(h.astype(jnp.bfloat16), w2_ref[...],
                          preferred_element_type=jnp.float32
                          ).astype(hw_ref.dtype)


# --------------------------------------------------------------------------
# pallas_call wrappers
# --------------------------------------------------------------------------
def _adj_matmul_stats(a_pad, rhs, tm, np_, fdim):
    nt = np_ // tm
    return pl.pallas_call(
        _adj_matmul_stats_kernel,
        grid=(nt,),
        in_specs=[
            pl.BlockSpec((tm, np_), lambda i: (i, 0)),     # A row tile (bf16)
            pl.BlockSpec((np_, fdim), lambda i: (0, 0)),   # RHS resident (bf16)
        ],
        out_specs=[
            pl.BlockSpec((tm, fdim), lambda i: (i, 0)),        # result tile
            pl.BlockSpec((SUBLANE, fdim), lambda i: (i, 0)),   # partial sum
            pl.BlockSpec((SUBLANE, fdim), lambda i: (i, 0)),   # partial sumsq
        ],
        out_shape=[
            jax.ShapeDtypeStruct((np_, fdim), jnp.float32),
            jax.ShapeDtypeStruct((nt * SUBLANE, fdim), jnp.float32),
            jax.ShapeDtypeStruct((nt * SUBLANE, fdim), jnp.float32),
        ],
        compiler_params=pltpu.CompilerParams(
            dimension_semantics=("parallel",),
            vmem_limit_bytes=VMEM_LIMIT),
    )(a_pad, rhs)


def _bn_act_proj(h1, scale1, shift1, w2p, tm, np_, hp, op):
    nt = np_ // tm
    return pl.pallas_call(
        _bn_act_proj_kernel,
        grid=(nt,),
        in_specs=[
            pl.BlockSpec((tm, hp), lambda i: (i, 0)),
            pl.BlockSpec((1, hp), lambda i: (0, 0)),
            pl.BlockSpec((1, hp), lambda i: (0, 0)),
            pl.BlockSpec((hp, op), lambda i: (0, 0)),
        ],
        out_specs=pl.BlockSpec((tm, op), lambda i: (i, 0)),
        out_shape=jax.ShapeDtypeStruct((np_, op), jnp.bfloat16),
        compiler_params=pltpu.CompilerParams(
            dimension_semantics=("parallel",),
            vmem_limit_bytes=VMEM_LIMIT),
    )(h1, scale1, shift1, w2p)


def _bn_affine(sum8, ssq8, n_true, gamma, beta):
    """Combine per-tile partial stats -> training-mode BN as one FMA."""
    s = jnp.sum(sum8, axis=0, keepdims=True)       # (1, F)
    sq = jnp.sum(ssq8, axis=0, keepdims=True)
    mean = s / n_true
    var = jnp.maximum(sq / n_true - mean * mean, 0.0)   # clamp: one-pass safety
    scale = gamma * lax.rsqrt(var + BN_EPS)             # rsqrt -> EUP slot
    shift = beta - mean * scale
    return scale, shift


# --------------------------------------------------------------------------
# Fused forward (GCN part of HG.forward)
# --------------------------------------------------------------------------
@jax.jit
def gcn_forward(H0, A_e, A_h, W1, W2, g1, beta1, g2, beta2):
    """2-layer GCN forward, training-mode BN (biases folded away by BN)."""
    N, in_ft = H0.shape
    hidden_ft = W1.shape[1]
    out_ft = W2.shape[1]
    Hp = _round_up(hidden_ft, LANE)     # lane-dense hidden dim
    Op = _round_up(out_ft, LANE)        # lane-dense output dim
    Np = _round_up(N, LANE)             # padded node axis (zero rows/cols: exact)
    tm = _row_tile(Np)
    bf = jnp.bfloat16

    # Adjacency: pad + cast are no-ops when the caller pre-applies
    # prepare_adjacency() (static graph -> cached bf16).
    ae = _pad2(A_e, Np, Np).astype(bf)
    ah = _pad2(A_h, Np, Np).astype(bf)

    # Layer-1 weight product hoisted out of the kernel (tiny, XLA).
    x = jnp.dot(_pad2(H0, Np, in_ft), _pad2(W1, in_ft, Hp),
                preferred_element_type=jnp.float32).astype(bf)

    w2p = _pad2(W2, Hp, Op).astype(bf)
    g1p, b1p = _pad2(g1, 1, Hp), _pad2(beta1, 1, Hp)
    g2p, b2p = _pad2(g2, 1, Op), _pad2(beta2, 1, Op)

    # ---- layer 1: h1 = A_e @ (H0 @ W1), with per-tile BN1 partial stats ----
    h1, s1, ss1 = _adj_matmul_stats(ae, x, tm, Np, Hp)
    scale1, shift1 = _bn_affine(s1, ss1, N, g1p, b1p)

    # ---- BN1 + LeakyReLU + (h @ W2)  (layer 2 reassociated: small dim first)
    hw = _bn_act_proj(h1, scale1, shift1, w2p, tm, Np, Hp, Op)

    # ---- layer 2: h2 = A_h @ hw, with per-tile BN2 partial stats -----------
    h2, s2, ss2 = _adj_matmul_stats(ah, hw, tm, Np, Op)
    scale2, shift2 = _bn_affine(s2, ss2, N, g2p, b2p)

    # Final BN2 normalize + un-pad: tiny elementwise, fused by XLA with slice.
    return h2[:N, :out_ft] * scale2[:, :out_ft] + shift2[:, :out_ft]


def kaiming_uniform(key, shape, a=0.0):
    # PyTorch kaiming_uniform_ on a 2D (rows, cols) tensor: fan_in = cols
    fan_in = shape[1]
    gain = math.sqrt(2.0 / (1.0 + a * a))
    bound = gain * math.sqrt(3.0 / fan_in)
    return jax.random.uniform(key, shape, jnp.float32, -bound, bound)


if __name__ == "__main__":
    # HG-style node groups: N = n_lnc + n_mi + n_mr + n_dis
    n_lnc, n_mi, n_mr, n_dis = 40, 32, 32, 24
    N = n_lnc + n_mi + n_mr + n_dis              # 128
    in_ft, hidden_ft, out_ft = 32, 64, 16

    key = jax.random.PRNGKey(0)
    (k_el, k_em, k_er, k_ed, k_ae, k_ah,
     k_w1, k_w2, k_b1, k_b2) = jax.random.split(key, 10)

    def xavier_normal(k, shape):
        std = math.sqrt(2.0 / (shape[0] + shape[1]))
        return std * jax.random.normal(k, shape, jnp.float32)

    # Embedding tables (xavier_normal init), concatenated -> H_0
    H0 = jnp.concatenate([
        xavier_normal(k_el, (n_lnc, in_ft)),
        xavier_normal(k_em, (n_mi, in_ft)),
        xavier_normal(k_er, (n_mr, in_ft)),
        xavier_normal(k_ed, (n_dis, in_ft)),
    ], axis=0)

    # Adjacency matrices (big_adj / A_h stand-ins; static across steps)
    A_e = jax.random.uniform(k_ae, (N, N), jnp.float32)
    A_h = jax.random.uniform(k_ah, (N, N), jnp.float32)

    # GCN parameters (PyTorch shapes / init)
    W1 = kaiming_uniform(k_w1, (in_ft, hidden_ft))
    W2 = kaiming_uniform(k_w2, (hidden_ft, out_ft))
    bias1 = jax.random.uniform(k_b1, (hidden_ft,), jnp.float32, -0.01, 0.01)
    bias2 = jax.random.uniform(k_b2, (out_ft,), jnp.float32, -0.01, 0.01)
    g1 = jnp.ones((1, hidden_ft), jnp.float32)
    beta1 = jnp.zeros((1, hidden_ft), jnp.float32)
    g2 = jnp.ones((1, out_ft), jnp.float32)
    beta2 = jnp.zeros((1, out_ft), jnp.float32)

    # Cache padded bf16 adjacencies ONCE (graph is static across steps).
    ae_c = prepare_adjacency(A_e)
    ah_c = prepare_adjacency(A_h)

    out = gcn_forward(H0, ae_c, ah_c, W1, W2, g1, beta1, g2, beta2)
    out = jax.block_until_ready(out)

    # HG.forward returns per-node-type splits
    h_lnc_out = out[:n_lnc]
    h_mi_out = out[n_lnc:n_lnc + n_mi]
    h_mr_out = out[n_lnc + n_mi:n_lnc + n_mi + n_mr]
    h_dis_out = out[n_lnc + n_mi + n_mr:]
    assert h_lnc_out.shape == (n_lnc, out_ft)
    assert h_mi_out.shape == (n_mi, out_ft)
    assert h_mr_out.shape == (n_mr, out_ft)
    assert h_dis_out.shape == (n_dis, out_ft)

    def bn2pass(h, g, b):
        m = h.mean(0, keepdims=True)
        v = ((h - m) ** 2).mean(0, keepdims=True)
        return (h - m) * lax.rsqrt(v + BN_EPS) * g + b

    # --- reference 1: self-consistent (same bf16 cast points / association,
    #     no bias: inert under training-mode BN) --------------------------------
    bf = jnp.bfloat16
    x_r = jnp.dot(H0, W1).astype(bf)
    h1_r = jnp.dot(A_e.astype(bf), x_r, preferred_element_type=jnp.float32)
    a1_r = bn2pass(h1_r, g1, beta1)
    a1_r = jnp.where(a1_r >= 0, a1_r, NEG_SLOPE * a1_r)
    hw_r = jnp.dot(a1_r.astype(bf), W2.astype(bf),
                   preferred_element_type=jnp.float32).astype(bf)
    h2_r = jnp.dot(A_h.astype(bf), hw_r, preferred_element_type=jnp.float32)
    expected = bn2pass(h2_r, g2, beta2)
    err1 = float(jnp.max(jnp.abs(out - expected)))
    assert jnp.allclose(out, expected, atol=2e-3, rtol=2e-3), err1

    # --- reference 2: fidelity vs the exact PyTorch op order in f32, WITH the
    #     bias adds (training-mode BN cancels them); looser tolerance because
    #     the kernel uses bf16 MXU operands --------------------------------------
    h = A_e @ H0
    h = h @ W1 + bias1
    h = bn2pass(h, g1, beta1)
    h = jnp.where(h >= 0, h, NEG_SLOPE * h)
    h = A_h @ h
    h = h @ W2 + bias2
    expected_torch = bn2pass(h, g2, beta2)
    err2 = float(jnp.max(jnp.abs(out - expected_torch)))
    assert err2 < 0.1, err2

    print("KERNEL_OK")
</pallas_src>

<mosaic_0001>
module attributes {stable_mosaic.version = 11 : i64} {
  func.func @_adj_matmul_stats_kernel(%arg0: i32, %arg1: memref<128x128xbf16, #tpu.memory_space<vmem>>, %arg2: memref<128x128xbf16, #tpu.memory_space<vmem>>, %arg3: memref<128x128xf32, #tpu.memory_space<vmem>>, %arg4: memref<8x128xf32, #tpu.memory_space<vmem>>, %arg5: memref<8x128xf32, #tpu.memory_space<vmem>>) attributes {dimension_semantics = [#tpu.dimension_semantics<parallel>], iteration_bounds = array<i64: 1>, scalar_prefetch = 0 : i64, scratch_operands = 0 : i64, tpu.core_type = #tpu.core_type<tc>, window_params = [{transform_indices = @transform_0, window_bounds = array<i64: 128, 128>}, {pipeline_mode = #tpu.pipeline_mode<synchronous>, transform_indices = @transform_1, window_bounds = array<i64: 128, 128>}, {transform_indices = @transform_2, window_bounds = array<i64: 128, 128>}, {transform_indices = @transform_3, window_bounds = array<i64: 8, 128>}, {transform_indices = @transform_4, window_bounds = array<i64: 8, 128>}]} {
    %c0 = arith.constant 0 : index
    %c0_0 = arith.constant 0 : index
    %0 = vector.load %arg1[%c0, %c0_0] : memref<128x128xbf16, #tpu.memory_space<vmem>>, vector<128x128xbf16>
    %c0_1 = arith.constant 0 : index
    %c0_2 = arith.constant 0 : index
    %1 = vector.load %arg2[%c0_1, %c0_2] : memref<128x128xbf16, #tpu.memory_space<vmem>>, vector<128x128xbf16>
    %cst = arith.constant dense<0.000000e+00> : vector<128x128xf32>
    %2 = tpu.matmul %0, %1, %cst {dimension_numbers = #tpu.dot_dimension_numbers<[1], [0], [0], [1], [0, 0, 1, 1], [], []>} : vector<128x128xbf16>, vector<128x128xbf16>, vector<128x128xf32> -> vector<128x128xf32>
    %c0_3 = arith.constant 0 : index
    %c0_4 = arith.constant 0 : index
    %3 = vector.load %arg3[%c0_3, %c0_4] : memref<128x128xf32, #tpu.memory_space<vmem>>, vector<128x128xf32>
    tpu.vector_store %arg3[%c0_3, %c0_4], %2 {strides = array<i32>} : memref<128x128xf32, #tpu.memory_space<vmem>>, vector<128x128xf32>,
    %cst_5 = arith.constant dense<0.000000e+00> : vector<128xf32>
    %4 = vector.multi_reduction <add>, %2, %cst_5 [0] : vector<128x128xf32> to vector<128xf32>
    %5 = vector.shape_cast %4 : vector<128xf32> to vector<1x128xf32>
    %cst_6 = arith.constant 1.250000e-01 : f32
    %6 = vector.broadcast %cst_6 : f32 to vector<1x128xf32>
    %7 = arith.mulf %5, %6 : vector<1x128xf32>
    %8 = vector.shape_cast %7 : vector<1x128xf32> to vector<1x128xf32>
    %9 = vector.broadcast %8 : vector<1x128xf32> to vector<8x128xf32>
    %c0_7 = arith.constant 0 : index
    %c0_8 = arith.constant 0 : index
    %10 = vector.load %arg4[%c0_7, %c0_8] : memref<8x128xf32, #tpu.memory_space<vmem>>, vector<8x128xf32>
    tpu.vector_store %arg4[%c0_7, %c0_8], %9 {strides = array<i32>} : memref<8x128xf32, #tpu.memory_space<vmem>>, vector<8x128xf32>,
    %11 = arith.mulf %2, %2 : vector<128x128xf32>
    %cst_9 = arith.constant dense<0.000000e+00> : vector<128xf32>
    %12 = vector.multi_reduction <add>, %11, %cst_9 [0] : vector<128x128xf32> to vector<128xf32>
    %13 = vector.shape_cast %12 : vector<128xf32> to vector<1x128xf32>
    %cst_10 = arith.constant 1.250000e-01 : f32
    %14 = vector.broadcast %cst_10 : f32 to vector<1x128xf32>
    %15 = arith.mulf %13, %14 : vector<1x128xf32>
    %16 = vector.shape_cast %15 : vector<1x128xf32> to vector<1x128xf32>
    %17 = vector.broadcast %16 : vector<1x128xf32> to vector<8x128xf32>
    %c0_11 = arith.constant 0 : index
    %c0_12 = arith.constant 0 : index
    %18 = vector.load %arg5[%c0_11, %c0_12] : memref<8x128xf32, #tpu.memory_space<vmem>>, vector<8x128xf32>
    tpu.vector_store %arg5[%c0_11, %c0_12], %17 {strides = array<i32>} : memref<8x128xf32, #tpu.memory_space<vmem>>, vector<8x128xf32>,
    return
  }
  func.func @transform_0(%arg0: i32) -> (i32, i32) {
    %c0_i32 = arith.constant 0 : i32
    %c0_i32_0 = arith.constant 0 : i32
    return %arg0, %c0_i32 : i32, i32
  }
  func.func @transform_1(%arg0: i32) -> (i32, i32) {
    %c0_i32 = arith.constant 0 : i32
    %c0_i32_0 = arith.constant 0 : i32
    %c0_i32_1 = arith.constant 0 : i32
    return %c0_i32, %c0_i32_0 : i32, i32
  }
  func.func @transform_2(%arg0: i32) -> (i32, i32) {
    %c0_i32 = arith.constant 0 : i32
    %c0_i32_0 = arith.constant 0 : i32
    return %arg0, %c0_i32 : i32, i32
  }
  func.func @transform_3(%arg0: i32) -> (i32, i32) {
    %c0_i32 = arith.constant 0 : i32
    %c0_i32_0 = arith.constant 0 : i32
    return %arg0, %c0_i32 : i32, i32
  }
  func.func @transform_4(%arg0: i32) -> (i32, i32) {
    %c0_i32 = arith.constant 0 : i32
    %c0_i32_0 = arith.constant 0 : i32
    return %arg0, %c0_i32 : i32, i32
  }
}

module attributes {stable_mosaic.version = 11 : i64} {
  func.func @_bn_act_proj_kernel(%arg0: i32, %arg1: memref<128x128xf32, #tpu.memory_space<vmem>>, %arg2: memref<1x128xf32, #tpu.memory_space<vmem>>, %arg3: memref<1x128xf32, #tpu.memory_space<vmem>>, %arg4: memref<128x128xbf16, #tpu.memory_space<vmem>>, %arg5: memref<128x128xbf16, #tpu.memory_space<vmem>>) attributes {dimension_semantics = [#tpu.dimension_semantics<parallel>], iteration_bounds = array<i64: 1>, scalar_prefetch = 0 : i64, scratch_operands = 0 : i64, tpu.core_type = #tpu.core_type<tc>, window_params = [{transform_indices = @transform_0, window_bounds = array<i64: 128, 128>}, {pipeline_mode = #tpu.pipeline_mode<synchronous>, transform_indices = @transform_1, window_bounds = array<i64: 1, 128>}, {pipeline_mode = #tpu.pipeline_mode<synchronous>, transform_indices = @transform_2, window_bounds = array<i64: 1, 128>}, {pipeline_mode = #tpu.pipeline_mode<synchronous>, transform_indices = @transform_3, window_bounds = array<i64: 128, 128>}, {transform_indices = @transform_4, window_bounds = array<i64: 128, 128>}]} {
    %c0 = arith.constant 0 : index
    %c0_0 = arith.constant 0 : index
    %0 = vector.load %arg1[%c0, %c0_0] : memref<128x128xf32, #tpu.memory_space<vmem>>, vector<128x128xf32>
    %c0_1 = arith.constant 0 : index
    %c0_2 = arith.constant 0 : index
    %1 = vector.load %arg2[%c0_1, %c0_2] : memref<1x128xf32, #tpu.memory_space<vmem>>, vector<1x128xf32>
    %2 = vector.broadcast %1 : vector<1x128xf32> to vector<128x128xf32>
    %3 = arith.mulf %0, %2 : vector<128x128xf32>
    %c0_3 = arith.constant 0 : index
    %c0_4 = arith.constant 0 : index
    %4 = vector.load %arg3[%c0_3, %c0_4] : memref<1x128xf32, #tpu.memory_space<vmem>>, vector<1x128xf32>
    %5 = vector.broadcast %4 : vector<1x128xf32> to vector<128x128xf32>
    %6 = arith.addf %3, %5 : vector<128x128xf32>
    %cst = arith.constant 0.000000e+00 : f32
    %7 = vector.broadcast %cst : f32 to vector<128x128xf32>
    %8 = arith.cmpf oge, %6, %7 : vector<128x128xf32>
    %cst_5 = arith.constant 0.00999999977 : f32
    %9 = vector.broadcast %cst_5 : f32 to vector<128x128xf32>
    %10 = arith.mulf %9, %6 : vector<128x128xf32>
    %11 = arith.select %8, %6, %10 : vector<128x128xi1>, vector<128x128xf32>
    %12 = arith.truncf %11 : vector<128x128xf32> to vector<128x128xbf16>
    %c0_6 = arith.constant 0 : index
    %c0_7 = arith.constant 0 : index
    %13 = vector.load %arg4[%c0_6, %c0_7] : memref<128x128xbf16, #tpu.memory_space<vmem>>, vector<128x128xbf16>
    %cst_8 = arith.constant dense<0.000000e+00> : vector<128x128xf32>
    %14 = tpu.matmul %12, %13, %cst_8 {dimension_numbers = #tpu.dot_dimension_numbers<[1], [0], [0], [1], [0, 0, 1, 1], [], []>} : vector<128x128xbf16>, vector<128x128xbf16>, vector<128x128xf32> -> vector<128x128xf32>
    %15 = arith.truncf %14 : vector<128x128xf32> to vector<128x128xbf16>
    %c0_9 = arith.constant 0 : index
    %c0_10 = arith.constant 0 : index
    %16 = vector.load %arg5[%c0_9, %c0_10] : memref<128x128xbf16, #tpu.memory_space<vmem>>, vector<128x128xbf16>
    tpu.vector_store %arg5[%c0_9, %c0_10], %15 {strides = array<i32>} : memref<128x128xbf16, #tpu.memory_space<vmem>>, vector<128x128xbf16>,
    return
  }
  func.func @transform_0(%arg0: i32) -> (i32, i32) {
    %c0_i32 = arith.constant 0 : i32
    %c0_i32_0 = arith.constant 0 : i32
    return %arg0, %c0_i32 : i32, i32
  }
  func.func @transform_1(%arg0: i32) -> (i32, i32) {
    %c0_i32 = arith.constant 0 : i32
    %c0_i32_0 = arith.constant 0 : i32
    %c0_i32_1 = arith.constant 0 : i32
    return %c0_i32, %c0_i32_0 : i32, i32
  }
  func.func @transform_2(%arg0: i32) -> (i32, i32) {
    %c0_i32 = arith.constant 0 : i32
    %c0_i32_0 = arith.constant 0 : i32
    %c0_i32_1 = arith.constant 0 : i32
    return %c0_i32, %c0_i32_0 : i32, i32
  }
  func.func @transform_3(%arg0: i32) -> (i32, i32) {
    %c0_i32 = arith.constant 0 : i32
    %c0_i32_0 = arith.constant 0 : i32
    %c0_i32_1 = arith.constant 0 : i32
    return %c0_i32, %c0_i32_0 : i32, i32
  }
  func.func @transform_4(%arg0: i32) -> (i32, i32) {
    %c0_i32 = arith.constant 0 : i32
    %c0_i32_0 = arith.constant 0 : i32
    return %arg0, %c0_i32 : i32, i32
  }
}

</mosaic_0001>

<llo_original>
// kernel: gcn_forward.3
$region0: #{gcn_forward.3}
  #allocation0 [shape = 'u32[]', space=smem, size = 0x4, offset = 0x4, fixed_abs, tag = 'smem constant byte address 0x4 - core index']
  #allocation1 [shape = 'u32[72,128]{1,0:T(1,128)}', space=vmem, size = 0x9000, scoped, tag = 'internal scratch']
  %s0 = inlined_call_operand.vmem [shape: bf16[128,128], index: 0, kind: input, shape index: {}]
  %s1 = inlined_call_operand.vmem [shape: bf16[128,128], index: 1, kind: input, shape index: {}]
  %s2 = inlined_call_operand.vmem [shape: f32[128,128], index: 2, kind: output, shape index: {0}]
  %s3 = inlined_call_operand.vmem [shape: f32[8,128], index: 3, kind: output, shape index: {1}]
  %s4 = inlined_call_operand.vmem [shape: f32[8,128], index: 4, kind: output, shape index: {2}]
  %5 = xla_tuple %s2, %s3, %s4
  %s6 = sld [smem:[#allocation0]]
  $region34: #{gcn_forward.3} parent=0
    _
  %s8 = ssub.s32 1, %s6
  %s9 = scalar_select 0, %s8, %s6
  // Predicated region
  $region2: #{gcn_forward.3} parent=0 // pred_check
    _
  $region3: #{gcn_forward.3} parent=0 // pred_check_branch
    %11 = sbr.rel (0) target = $region5
  $region4: #{gcn_forward.3} parent=0 // pred_region
    _
  $region5: #{gcn_forward.3} parent=0 // pred_fallthru
    _
  // Predicated region
  $region6: #{gcn_forward.3} parent=0 // pred_check
    _
  $region7: #{gcn_forward.3} parent=0 // pred_check_branch
    %13 = sbr.rel (0) target = $region9
  $region8: #{gcn_forward.3} parent=0 // pred_region
    _
  $region9: #{gcn_forward.3} parent=0 // pred_fallthru
    _
  %v14 = vld [vmem:[%s0] sm:$0xf]
  %v15 = vld [vmem:[%s0 + $0x4] sm:$0xf]
  %v16 = vld [vmem:[%s0 + $0x8] sm:$0xf]
  %v17 = vld [vmem:[%s0 + $0xc] sm:$0xf]
  %v18 = vld [vmem:[%s0 + $0x10] sm:$0xf]
  %v19 = vld [vmem:[%s0 + $0x14] sm:$0xf]
  %v20 = vld [vmem:[%s0 + $0x18] sm:$0xf]
  %v21 = vld [vmem:[%s0 + $0x1c] sm:$0xf]
  %v22 = vld [vmem:[%s0 + $0x20] sm:$0xf]
  %v23 = vld [vmem:[%s0 + $0x24] sm:$0xf]
  %v24 = vld [vmem:[%s0 + $0x28] sm:$0xf]
  %v25 = vld [vmem:[%s0 + $0x2c] sm:$0xf]
  %v26 = vld [vmem:[%s0 + $0x30] sm:$0xf]
  %v27 = vld [vmem:[%s0 + $0x34] sm:$0xf]
  %v28 = vld [vmem:[%s0 + $0x38] sm:$0xf]
  %v29 = vld [vmem:[%s0 + $0x3c] sm:$0xf]
  %v30 = vld [vmem:[%s1] sm:$0xf]
  %v31 = vld [vmem:[%s1 + $0x4] sm:$0xf]
  %v32 = vld [vmem:[%s1 + $0x8] sm:$0xf]
  %v33 = vld [vmem:[%s1 + $0xc] sm:$0xf]
  %v34 = vld [vmem:[%s1 + $0x10] sm:$0xf]
  %v35 = vld [vmem:[%s1 + $0x14] sm:$0xf]
  %v36 = vld [vmem:[%s1 + $0x18] sm:$0xf]
  %v37 = vld [vmem:[%s1 + $0x1c] sm:$0xf]
  %v38 = vld [vmem:[%s1 + $0x20] sm:$0xf]
  %v39 = vld [vmem:[%s1 + $0x24] sm:$0xf]
  %v40 = vld [vmem:[%s1 + $0x28] sm:$0xf]
  %v41 = vld [vmem:[%s1 + $0x2c] sm:$0xf]
  %v42 = vld [vmem:[%s1 + $0x30] sm:$0xf]
  %v43 = vld [vmem:[%s1 + $0x34] sm:$0xf]
  %v44 = vld [vmem:[%s1 + $0x38] sm:$0xf]
  %v45 = vld [vmem:[%s1 + $0x3c] sm:$0xf]
  %v62 = vunpack.c.l.b16 %v14
  %v63 = vunpack.c.l.b16 %v15
  %v64 = vunpack.c.l.b16 %v16
  %v65 = vunpack.c.l.b16 %v17
  %v66 = vunpack.c.l.b16 %v18
  %v67 = vunpack.c.l.b16 %v19
  %v68 = vunpack.c.l.b16 %v20
  %v69 = vunpack.c.l.b16 %v21
  %v70 = vunpack.c.l.b16 %v22
  %v71 = vunpack.c.l.b16 %v23
  %v72 = vunpack.c.l.b16 %v24
  %v73 = vunpack.c.l.b16 %v25
  %v74 = vunpack.c.l.b16 %v26
  %v75 = vunpack.c.l.b16 %v27
  %v76 = vunpack.c.l.b16 %v28
  %v77 = vunpack.c.l.b16 %v29
  %v78 = vpack.c.b16 %v63, %v62
  %v79 = vpack.c.b16 %v65, %v64
  %v80 = vpack.c.b16 %v67, %v66
  %v81 = vpack.c.b16 %v69, %v68
  %v82 = vpack.c.b16 %v71, %v70
  %v83 = vpack.c.b16 %v73, %v72
  %v84 = vpack.c.b16 %v75, %v74
  %v85 = vpack.c.b16 %v77, %v76
  %v110 = vunpack.c.l.b16 %v30
  %v111 = vunpack.c.l.b16 %v31
  %v112 = vunpack.c.l.b16 %v32
  %v113 = vunpack.c.l.b16 %v33
  %v114 = vunpack.c.l.b16 %v34
  %v115 = vunpack.c.l.b16 %v35
  %v116 = vunpack.c.l.b16 %v36
  %v117 = vunpack.c.l.b16 %v37
  %v118 = vunpack.c.l.b16 %v38
  %v119 = vunpack.c.l.b16 %v39
  %v120 = vunpack.c.l.b16 %v40
  %v121 = vunpack.c.l.b16 %v41
  %v122 = vunpack.c.l.b16 %v42
  %v123 = vunpack.c.l.b16 %v43
  %v124 = vunpack.c.l.b16 %v44
  %v125 = vunpack.c.l.b16 %v45
  %v126 = vpack.c.b16 %v111, %v110
  %v127 = vpack.c.b16 %v113, %v112
  %v128 = vpack.c.b16 %v115, %v114
  %v129 = vpack.c.b16 %v117, %v116
  %v130 = vpack.c.b16 %v119, %v118
  %v131 = vpack.c.b16 %v121, %v120
  %v132 = vpack.c.b16 %v123, %v122
  %v133 = vpack.c.b16 %v125, %v124
  %142 = vmatpush.bf16.msra.mxu0 %v133
  %143 = vmatpush.bf16.msra.mxu0 %v132
  %144 = vmatpush.bf16.msra.mxu0 %v131
  %145 = vmatpush.bf16.msra.mxu0 %v130
  %146 = vmatpush.bf16.msra.mxu0 %v129
  %147 = vmatpush.bf16.msra.mxu0 %v128
  %148 = vmatpush.bf16.msra.mxu0 %v127
  %149 = vmatpush.bf16.msra.mxu0 %v126
  %150 = vmatmul.bf16.gmra.mxu0 %v78
  %v151 = vpop.f32.mrf.mxu0
  %v152 = vadd.f32 0.0, %v151
  %v153 = vpop.f32.mrf.mxu0
  %v154 = vadd.f32 0.0, %v153
  %155 = vmatmul.bf16.gmra.mxu0 %v79
  %v156 = vpop.f32.mrf.mxu0
  %v157 = vadd.f32 0.0, %v156
  %v158 = vpop.f32.mrf.mxu0
  %v159 = vadd.f32 0.0, %v158
  %160 = vmatmul.bf16.gmra.mxu0 %v80
  %v161 = vpop.f32.mrf.mxu0
  %v162 = vadd.f32 0.0, %v161
  %v163 = vpop.f32.mrf.mxu0
  %v164 = vadd.f32 0.0, %v163
  %165 = vmatmul.bf16.gmra.mxu0 %v81
  %v166 = vpop.f32.mrf.mxu0
  %v167 = vadd.f32 0.0, %v166
  %v168 = vpop.f32.mrf.mxu0
  %v169 = vadd.f32 0.0, %v168
  %170 = vmatmul.bf16.gmra.mxu0 %v82
  %v171 = vpop.f32.mrf.mxu0
  %v172 = vadd.f32 0.0, %v171
  %v173 = vpop.f32.mrf.mxu0
  %v174 = vadd.f32 0.0, %v173
  %175 = vmatmul.bf16.gmra.mxu0 %v83
  %v176 = vpop.f32.mrf.mxu0
  %v177 = vadd.f32 0.0, %v176
  %v178 = vpop.f32.mrf.mxu0
  %v179 = vadd.f32 0.0, %v178
  %180 = vmatmul.bf16.gmra.mxu0 %v84
  %v181 = vpop.f32.mrf.mxu0
  %v182 = vadd.f32 0.0, %v181
  %v183 = vpop.f32.mrf.mxu0
  %v184 = vadd.f32 0.0, %v183
  %185 = vmatmul.bf16.gmra.mxu0 %v85
  %v186 = vpop.f32.mrf.mxu0
  %v187 = vadd.f32 0.0, %v186
  %v188 = vpop.f32.mrf.mxu0
  %v189 = vadd.f32 0.0, %v188
  %190 = vdwg.mxu0
  %191 = vst [vmem:[%s2] sm:$0xff] %v152
  %192 = vst [vmem:[%s2 + $0x8] sm:$0xff] %v154
  %193 = vst [vmem:[%s2 + $0x10] sm:$0xff] %v157
  %194 = vst [vmem:[%s2 + $0x18] sm:$0xff] %v159
  %195 = vst [vmem:[%s2 + $0x20] sm:$0xff] %v162
  %196 = vst [vmem:[%s2 + $0x28] sm:$0xff] %v164
  %197 = vst [vmem:[%s2 + $0x30] sm:$0xff] %v167
  %198 = vst [vmem:[%s2 + $0x38] sm:$0xff] %v169
  %199 = vst [vmem:[%s2 + $0x40] sm:$0xff] %v172
  %200 = vst [vmem:[%s2 + $0x48] sm:$0xff] %v174
  %201 = vst [vmem:[%s2 + $0x50] sm:$0xff] %v177
  %202 = vst [vmem:[%s2 + $0x58] sm:$0xff] %v179
  %203 = vst [vmem:[%s2 + $0x60] sm:$0xff] %v182
  %204 = vst [vmem:[%s2 + $0x68] sm:$0xff] %v184
  %205 = vst [vmem:[%s2 + $0x70] sm:$0xff] %v187
  %206 = vst [vmem:[%s2 + $0x78] sm:$0xff] %v189
  %v207 = vadd.f32 %v152, %v154
  %v208 = vadd.f32 %v207, %v157
  %v209 = vadd.f32 %v208, %v159
  %v210 = vadd.f32 %v209, %v162
  %v211 = vadd.f32 %v210, %v164
  %v212 = vadd.f32 %v211, %v167
  %v213 = vadd.f32 %v212, %v169
  %v214 = vadd.f32 %v213, %v172
  %v215 = vadd.f32 %v214, %v174
  %v216 = vadd.f32 %v215, %v177
  %v217 = vadd.f32 %v216, %v179
  %v218 = vadd.f32 %v217, %v182
  %v219 = vadd.f32 %v218, %v184
  %v220 = vadd.f32 %v219, %v187
  %v221 = vadd.f32 %v220, %v189
  %v222 = vrot.slane %v221, 4
  %v223 = vadd.f32 %v221, %v222
  %v224 = vrot.slane %v223, 2
  %v225 = vadd.f32 %v223, %v224
  %v226 = vrot.slane %v225, 1
  %v227 = vadd.f32 %v225, %v226
  %v228 = vmul.f32 %v227, 0.125
  %229 = vst [vmem:[%s3] sm:$0xff] %v228
  %v230 = vmul.f32 %v152, %v152
  %v231 = vmul.f32 %v154, %v154
  %v232 = vmul.f32 %v157, %v157
  %v233 = vmul.f32 %v159, %v159
  %v234 = vmul.f32 %v162, %v162
  %v235 = vmul.f32 %v164, %v164
  %v236 = vmul.f32 %v167, %v167
  %v237 = vmul.f32 %v169, %v169
  %v238 = vmul.f32 %v172, %v172
  %v239 = vmul.f32 %v174, %v174
  %v240 = vmul.f32 %v177, %v177
  %v241 = vmul.f32 %v179, %v179
  %v242 = vmul.f32 %v182, %v182
  %v243 = vmul.f32 %v184, %v184
  %v244 = vmul.f32 %v187, %v187
  %v245 = vmul.f32 %v189, %v189
  %v246 = vadd.f32 %v230, %v231
  %v247 = vadd.f32 %v246, %v232
  %v248 = vadd.f32 %v247, %v233
  %v249 = vadd.f32 %v248, %v234
  %v250 = vadd.f32 %v249, %v235
  %v251 = vadd.f32 %v250, %v236
  %v252 = vadd.f32 %v251, %v237
  %v253 = vadd.f32 %v252, %v238
  %v254 = vadd.f32 %v253, %v239
  %v255 = vadd.f32 %v254, %v240
  %v256 = vadd.f32 %v255, %v241
  %v257 = vadd.f32 %v256, %v242
  %v258 = vadd.f32 %v257, %v243
  %v259 = vadd.f32 %v258, %v244
  %v260 = vadd.f32 %v259, %v245
  %v261 = vrot.slane %v260, 4
  %v262 = vadd.f32 %v260, %v261
  %v263 = vrot.slane %v262, 2
  %v264 = vadd.f32 %v262, %v263
  %v265 = vrot.slane %v264, 1
  %v266 = vadd.f32 %v264, %v265
  %v267 = vmul.f32 %v266, 0.125
  %268 = vst [vmem:[%s4] sm:$0xff] %v267
  // Predicated region
  $region10: #{gcn_forward.3} parent=0 // pred_check
    _
  $region11: #{gcn_forward.3} parent=0 // pred_check_branch
    %270 = sbr.rel (0) target = $region13
  $region12: #{gcn_forward.3} parent=0 // pred_region
    _
  $region13: #{gcn_forward.3} parent=0 // pred_fallthru
    _
  // Predicated region
  $region14: #{gcn_forward.3} parent=0 // pred_check
    _
  $region15: #{gcn_forward.3} parent=0 // pred_check_branch
    %272 = sbr.rel (0) target = $region17
  $region16: #{gcn_forward.3} parent=0 // pred_region
    _
  $region17: #{gcn_forward.3} parent=0 // pred_fallthru
    _
  // Predicated region
  $region18: #{gcn_forward.3} parent=0 // pred_check
    _
  $region19: #{gcn_forward.3} parent=0 // pred_check_branch
    %274 = sbr.rel (0) target = $region21
  $region20: #{gcn_forward.3} parent=0 // pred_region
    _
  $region21: #{gcn_forward.3} parent=0 // pred_fallthru
    _
  // Predicated region
  $region22: #{gcn_forward.3} parent=0 // pred_check
    _
  $region23: #{gcn_forward.3} parent=0 // pred_check_branch
    %276 = sbr.rel (0) target = $region25
  $region24: #{gcn_forward.3} parent=0 // pred_region
    _
  $region25: #{gcn_forward.3} parent=0 // pred_fallthru
    _
  // Predicated region
  $region26: #{gcn_forward.3} parent=0 // pred_check
    _
  $region27: #{gcn_forward.3} parent=0 // pred_check_branch
    %278 = sbr.rel (0) target = $region29
  $region28: #{gcn_forward.3} parent=0 // pred_region
    _
  $region29: #{gcn_forward.3} parent=0 // pred_fallthru
    _
  // Predicated region
  $region30: #{gcn_forward.3} parent=0 // pred_check
    _
  $region31: #{gcn_forward.3} parent=0 // pred_check_branch
    %280 = sbr.rel (0) target = $region33
  $region32: #{gcn_forward.3} parent=0 // pred_region
    _
  $region33: #{gcn_forward.3} parent=0 // pred_fallthru
    _

// kernel: gcn_forward.4
$region0: #{gcn_forward.4}
  #allocation0 [shape = 'u32[]', space=smem, size = 0x4, offset = 0x4, fixed_abs, tag = 'smem constant byte address 0x4 - core index']
  #allocation1 [shape = 'u32[72,128]{1,0:T(1,128)}', space=vmem, size = 0x9000, scoped, tag = 'internal scratch']
  %s0 = inlined_call_operand.vmem [shape: f32[128,128], index: 0, kind: input, shape index: {}]
  %s1 = inlined_call_operand.vmem [shape: f32[1,128], index: 1, kind: input, shape index: {}]
  %s2 = inlined_call_operand.vmem [shape: f32[1,128], index: 2, kind: input, shape index: {}]
  %s3 = inlined_call_operand.vmem [shape: bf16[128,128], index: 3, kind: input, shape index: {}]
  %s4 = inlined_call_operand.vmem [shape: bf16[128,128], index: 4, kind: output, shape index: {}]
  %s5 = sld [smem:[#allocation0]]
  $region26: #{gcn_forward.4} parent=0
    _
  %s7 = ssub.s32 1, %s5
  %s8 = scalar_select 0, %s7, %s5
  // Predicated region
  $region2: #{gcn_forward.4} parent=0 // pred_check
    _
  $region3: #{gcn_forward.4} parent=0 // pred_check_branch
    %10 = sbr.rel (0) target = $region5
  $region4: #{gcn_forward.4} parent=0 // pred_region
    _
  $region5: #{gcn_forward.4} parent=0 // pred_fallthru
    _
  // Predicated region
  $region6: #{gcn_forward.4} parent=0 // pred_check
    _
  $region7: #{gcn_forward.4} parent=0 // pred_check_branch
    %12 = sbr.rel (0) target = $region9
  $region8: #{gcn_forward.4} parent=0 // pred_region
    _
  $region9: #{gcn_forward.4} parent=0 // pred_fallthru
    _
  // Predicated region
  $region10: #{gcn_forward.4} parent=0 // pred_check
    _
  $region11: #{gcn_forward.4} parent=0 // pred_check_branch
    %14 = sbr.rel (0) target = $region13
  $region12: #{gcn_forward.4} parent=0 // pred_region
    _
  $region13: #{gcn_forward.4} parent=0 // pred_fallthru
    _
  // Predicated region
  $region14: #{gcn_forward.4} parent=0 // pred_check
    _
  $region15: #{gcn_forward.4} parent=0 // pred_check_branch
    %16 = sbr.rel (0) target = $region17
  $region16: #{gcn_forward.4} parent=0 // pred_region
    _
  $region17: #{gcn_forward.4} parent=0 // pred_fallthru
    _
  %v17 = vld [vmem:[%s0] sm:$0xff]
  %v18 = vld [vmem:[%s0 + $0x8] sm:$0xff]
  %v19 = vld [vmem:[%s0 + $0x10] sm:$0xff]
  %v20 = vld [vmem:[%s0 + $0x18] sm:$0xff]
  %v21 = vld [vmem:[%s0 + $0x20] sm:$0xff]
  %v22 = vld [vmem:[%s0 + $0x28] sm:$0xff]
  %v23 = vld [vmem:[%s0 + $0x30] sm:$0xff]
  %v24 = vld [vmem:[%s0 + $0x38] sm:$0xff]
  %v25 = vld [vmem:[%s0 + $0x40] sm:$0xff]
  %v26 = vld [vmem:[%s0 + $0x48] sm:$0xff]
  %v27 = vld [vmem:[%s0 + $0x50] sm:$0xff]
  %v28 = vld [vmem:[%s0 + $0x58] sm:$0xff]
  %v29 = vld [vmem:[%s0 + $0x60] sm:$0xff]
  %v30 = vld [vmem:[%s0 + $0x68] sm:$0xff]
  %v31 = vld [vmem:[%s0 + $0x70] sm:$0xff]
  %v32 = vld [vmem:[%s0 + $0x78] sm:$0xff]
  %v33 = vld [vmem:[%s1] sm:$0x1]
  %v35 = vperm.slane %v33, 0
  %v37 = vmul.f32 %v17, %v35
  %v38 = vmul.f32 %v18, %v35
  %v39 = vmul.f32 %v19, %v35
  %v40 = vmul.f32 %v20, %v35
  %v41 = vmul.f32 %v21, %v35
  %v42 = vmul.f32 %v22, %v35
  %v43 = vmul.f32 %v23, %v35
  %v44 = vmul.f32 %v24, %v35
  %v45 = vmul.f32 %v25, %v35
  %v46 = vmul.f32 %v26, %v35
  %v47 = vmul.f32 %v27, %v35
  %v48 = vmul.f32 %v28, %v35
  %v49 = vmul.f32 %v29, %v35
  %v50 = vmul.f32 %v30, %v35
  %v51 = vmul.f32 %v31, %v35
  %v52 = vmul.f32 %v32, %v35
  %v53 = vld [vmem:[%s2] sm:$0x1]
  %v55 = vperm.slane %v53, 0
  %v57 = vadd.f32 %v37, %v55
  %v58 = vadd.f32 %v38, %v55
  %v59 = vadd.f32 %v39, %v55
  %v60 = vadd.f32 %v40, %v55
  %v61 = vadd.f32 %v41, %v55
  %v62 = vadd.f32 %v42, %v55
  %v63 = vadd.f32 %v43, %v55
  %v64 = vadd.f32 %v44, %v55
  %v65 = vadd.f32 %v45, %v55
  %v66 = vadd.f32 %v46, %v55
  %v67 = vadd.f32 %v47, %v55
  %v68 = vadd.f32 %v48, %v55
  %v69 = vadd.f32 %v49, %v55
  %v70 = vadd.f32 %v50, %v55
  %v71 = vadd.f32 %v51, %v55
  %v72 = vadd.f32 %v52, %v55
  %vm73 = vcmp.ge.f32.partialorder %v57, 0.0
  %vm74 = vcmp.ge.f32.partialorder %v58, 0.0
  %vm75 = vcmp.ge.f32.partialorder %v59, 0.0
  %vm76 = vcmp.ge.f32.partialorder %v60, 0.0
  %vm77 = vcmp.ge.f32.partialorder %v61, 0.0
  %vm78 = vcmp.ge.f32.partialorder %v62, 0.0
  %vm79 = vcmp.ge.f32.partialorder %v63, 0.0
  %vm80 = vcmp.ge.f32.partialorder %v64, 0.0
  %vm81 = vcmp.ge.f32.partialorder %v65, 0.0
  %vm82 = vcmp.ge.f32.partialorder %v66, 0.0
  %vm83 = vcmp.ge.f32.partialorder %v67, 0.0
  %vm84 = vcmp.ge.f32.partialorder %v68, 0.0
  %vm85 = vcmp.ge.f32.partialorder %v69, 0.0
  %vm86 = vcmp.ge.f32.partialorder %v70, 0.0
  %vm87 = vcmp.ge.f32.partialorder %v71, 0.0
  %vm88 = vcmp.ge.f32.partialorder %v72, 0.0
  %v89 = vmul.f32 %v57, 0.01
  %v90 = vmul.f32 %v58, 0.01
  %v91 = vmul.f32 %v59, 0.01
  %v92 = vmul.f32 %v60, 0.01
  %v93 = vmul.f32 %v61, 0.01
  %v94 = vmul.f32 %v62, 0.01
  %v95 = vmul.f32 %v63, 0.01
  %v96 = vmul.f32 %v64, 0.01
  %v97 = vmul.f32 %v65, 0.01
  %v98 = vmul.f32 %v66, 0.01
  %v99 = vmul.f32 %v67, 0.01
  %v100 = vmul.f32 %v68, 0.01
  %v101 = vmul.f32 %v69, 0.01
  %v102 = vmul.f32 %v70, 0.01
  %v103 = vmul.f32 %v71, 0.01
  %v104 = vmul.f32 %v72, 0.01
  %v105 = vsel %vm73, %v57, %v89
  %v106 = vsel %vm74, %v58, %v90
  %v107 = vsel %vm75, %v59, %v91
  %v108 = vsel %vm76, %v60, %v92
  %v109 = vsel %vm77, %v61, %v93
  %v110 = vsel %vm78, %v62, %v94
  %v111 = vsel %vm79, %v63, %v95
  %v112 = vsel %vm80, %v64, %v96
  %v113 = vsel %vm81, %v65, %v97
  %v114 = vsel %vm82, %v66, %v98
  %v115 = vsel %vm83, %v67, %v99
  %v116 = vsel %vm84, %v68, %v100
  %v117 = vsel %vm85, %v69, %v101
  %v118 = vsel %vm86, %v70, %v102
  %v119 = vsel %vm87, %v71, %v103
  %v120 = vsel %vm88, %v72, %v104
  %v121 = vpack.c.bf16 %v106, %v105
  %v122 = vpack.c.bf16 %v108, %v107
  %v123 = vpack.c.bf16 %v110, %v109
  %v124 = vpack.c.bf16 %v112, %v111
  %v125 = vpack.c.bf16 %v114, %v113
  %v126 = vpack.c.bf16 %v116, %v115
  %v127 = vpack.c.bf16 %v118, %v117
  %v128 = vpack.c.bf16 %v120, %v119
  %v129 = vld [vmem:[%s3] sm:$0xf]
  %v130 = vld [vmem:[%s3 + $0x4] sm:$0xf]
  %v131 = vld [vmem:[%s3 + $0x8] sm:$0xf]
  %v132 = vld [vmem:[%s3 + $0xc] sm:$0xf]
  %v133 = vld [vmem:[%s3 + $0x10] sm:$0xf]
  %v134 = vld [vmem:[%s3 + $0x14] sm:$0xf]
  %v135 = vld [vmem:[%s3 + $0x18] sm:$0xf]
  %v136 = vld [vmem:[%s3 + $0x1c] sm:$0xf]
  %v137 = vld [vmem:[%s3 + $0x20] sm:$0xf]
  %v138 = vld [vmem:[%s3 + $0x24] sm:$0xf]
  %v139 = vld [vmem:[%s3 + $0x28] sm:$0xf]
  %v140 = vld [vmem:[%s3 + $0x2c] sm:$0xf]
  %v141 = vld [vmem:[%s3 + $0x30] sm:$0xf]
  %v142 = vld [vmem:[%s3 + $0x34] sm:$0xf]
  %v143 = vld [vmem:[%s3 + $0x38] sm:$0xf]
  %v144 = vld [vmem:[%s3 + $0x3c] sm:$0xf]
  %v161 = vunpack.c.l.b16 %v129
  %v162 = vunpack.c.l.b16 %v130
  %v163 = vunpack.c.l.b16 %v131
  %v164 = vunpack.c.l.b16 %v132
  %v165 = vunpack.c.l.b16 %v133
  %v166 = vunpack.c.l.b16 %v134
  %v167 = vunpack.c.l.b16 %v135
  %v168 = vunpack.c.l.b16 %v136
  %v169 = vunpack.c.l.b16 %v137
  %v170 = vunpack.c.l.b16 %v138
  %v171 = vunpack.c.l.b16 %v139
  %v172 = vunpack.c.l.b16 %v140
  %v173 = vunpack.c.l.b16 %v141
  %v174 = vunpack.c.l.b16 %v142
  %v175 = vunpack.c.l.b16 %v143
  %v176 = vunpack.c.l.b16 %v144
  %v177 = vpack.c.b16 %v162, %v161
  %v178 = vpack.c.b16 %v164, %v163
  %v179 = vpack.c.b16 %v166, %v165
  %v180 = vpack.c.b16 %v168, %v167
  %v181 = vpack.c.b16 %v170, %v169
  %v182 = vpack.c.b16 %v172, %v171
  %v183 = vpack.c.b16 %v174, %v173
  %v184 = vpack.c.b16 %v176, %v175
  %193 = vmatpush.bf16.msra.mxu0 %v184
  %194 = vmatpush.bf16.msra.mxu0 %v183
  %195 = vmatpush.bf16.msra.mxu0 %v182
  %196 = vmatpush.bf16.msra.mxu0 %v181
  %197 = vmatpush.bf16.msra.mxu0 %v180
  %198 = vmatpush.bf16.msra.mxu0 %v179
  %199 = vmatpush.bf16.msra.mxu0 %v178
  %200 = vmatpush.bf16.msra.mxu0 %v177
  %201 = vmatmul.bf16.gmra.mxu0 %v121
  %v202 = vpop.f32.mrf.mxu0
  %v203 = vadd.f32 0.0, %v202
  %v204 = vpop.f32.mrf.mxu0
  %v205 = vadd.f32 0.0, %v204
  %206 = vmatmul.bf16.gmra.mxu0 %v122
  %v207 = vpop.f32.mrf.mxu0
  %v208 = vadd.f32 0.0, %v207
  %v209 = vpop.f32.mrf.mxu0
  %v210 = vadd.f32 0.0, %v209
  %211 = vmatmul.bf16.gmra.mxu0 %v123
  %v212 = vpop.f32.mrf.mxu0
  %v213 = vadd.f32 0.0, %v212
  %v214 = vpop.f32.mrf.mxu0
  %v215 = vadd.f32 0.0, %v214
  %216 = vmatmul.bf16.gmra.mxu0 %v124
  %v217 = vpop.f32.mrf.mxu0
  %v218 = vadd.f32 0.0, %v217
  %v219 = vpop.f32.mrf.mxu0
  %v220 = vadd.f32 0.0, %v219
  %221 = vmatmul.bf16.gmra.mxu0 %v125
  %v222 = vpop.f32.mrf.mxu0
  %v223 = vadd.f32 0.0, %v222
  %v224 = vpop.f32.mrf.mxu0
  %v225 = vadd.f32 0.0, %v224
  %226 = vmatmul.bf16.gmra.mxu0 %v126
  %v227 = vpop.f32.mrf.mxu0
  %v228 = vadd.f32 0.0, %v227
  %v229 = vpop.f32.mrf.mxu0
  %v230 = vadd.f32 0.0, %v229
  %231 = vmatmul.bf16.gmra.mxu0 %v127
  %v232 = vpop.f32.mrf.mxu0
  %v233 = vadd.f32 0.0, %v232
  %v234 = vpop.f32.mrf.mxu0
  %v235 = vadd.f32 0.0, %v234
  %236 = vmatmul.bf16.gmra.mxu0 %v128
  %v237 = vpop.f32.mrf.mxu0
  %v238 = vadd.f32 0.0, %v237
  %v239 = vpop.f32.mrf.mxu0
  %v240 = vadd.f32 0.0, %v239
  %241 = vdwg.mxu0
  %v242 = vpack.c.bf16 %v203, %v203
  %v243 = vpack.c.bf16 %v205, %v205
  %v244 = vpack.c.bf16 %v208, %v208
  %v245 = vpack.c.bf16 %v210, %v210
  %v246 = vpack.c.bf16 %v213, %v213
  %v247 = vpack.c.bf16 %v215, %v215
  %v248 = vpack.c.bf16 %v218, %v218
  %v249 = vpack.c.bf16 %v220, %v220
  %v250 = vpack.c.bf16 %v223, %v223
  %v251 = vpack.c.bf16 %v225, %v225
  %v252 = vpack.c.bf16 %v228, %v228
  %v253 = vpack.c.bf16 %v230, %v230
  %v254 = vpack.c.bf16 %v233, %v233
  %v255 = vpack.c.bf16 %v235, %v235
  %v256 = vpack.c.bf16 %v238, %v238
  %v257 = vpack.c.bf16 %v240, %v240
  %258 = vst [vmem:[%s4] sm:$0xf] %v242
  %259 = vst [vmem:[%s4 + $0x4] sm:$0xf] %v243
  %260 = vst [vmem:[%s4 + $0x8] sm:$0xf] %v244
  %261 = vst [vmem:[%s4 + $0xc] sm:$0xf] %v245
  %262 = vst [vmem:[%s4 + $0x10] sm:$0xf] %v246
  %263 = vst [vmem:[%s4 + $0x14] sm:$0xf] %v247
  %264 = vst [vmem:[%s4 + $0x18] sm:$0xf] %v248
  %265 = vst [vmem:[%s4 + $0x1c] sm:$0xf] %v249
  %266 = vst [vmem:[%s4 + $0x20] sm:$0xf] %v250
  %267 = vst [vmem:[%s4 + $0x24] sm:$0xf] %v251
  %268 = vst [vmem:[%s4 + $0x28] sm:$0xf] %v252
  %269 = vst [vmem:[%s4 + $0x2c] sm:$0xf] %v253
  %270 = vst [vmem:[%s4 + $0x30] sm:$0xf] %v254
  %271 = vst [vmem:[%s4 + $0x34] sm:$0xf] %v255
  %272 = vst [vmem:[%s4 + $0x38] sm:$0xf] %v256
  %273 = vst [vmem:[%s4 + $0x3c] sm:$0xf] %v257
  // Predicated region
  $region18: #{gcn_forward.4} parent=0 // pred_check
    _
  $region19: #{gcn_forward.4} parent=0 // pred_check_branch
    %275 = sbr.rel (0) target = $region21
  $region20: #{gcn_forward.4} parent=0 // pred_region
    _
  $region21: #{gcn_forward.4} parent=0 // pred_fallthru
    _
  // Predicated region
  $region22: #{gcn_forward.4} parent=0 // pred_check
    _
  $region23: #{gcn_forward.4} parent=0 // pred_check_branch
    %277 = sbr.rel (0) target = $region25
  $region24: #{gcn_forward.4} parent=0 // pred_region
    _
  $region25: #{gcn_forward.4} parent=0 // pred_fallthru
    _

</llo_original>
